<compile_context>
chip_gen: v5e
topology: v5e:2x2
jax: 0.10.0
libtpu: 0.0.40
codegen_flags: <defaults>
</compile_context>

<pallas_src>
import functools

import jax
import jax.numpy as jnp
import numpy as np
from jax.experimental import pallas as pl
from jax.experimental.pallas import tpu as pltpu


# --------------------------------------------------------------------------- #
# Offline operator folding (host side, float64, cached per shape).             #
# --------------------------------------------------------------------------- #
@functools.lru_cache(maxsize=None)
def _folded_lr_np(h, w):
    """Complex (L, R), float64: both DFT passes and both H/W fftshifts folded.

    out_image = Re(L @ X @ R) reproduces
      ifft2(fftshift(1 * fftshift(fft2(X, norm='forward'))), norm='forward').real
    i.e. the 'highpass' factor (constant 1, the reproduced mask bug).
    """
    ih = np.arange(h)
    iw = np.arange(w)
    # forward DFT, norm='forward' (1/N scaling on the forward pass)
    a = np.exp(-2j * np.pi * np.outer(ih, ih) / h) / h
    b = np.exp(-2j * np.pi * np.outer(iw, iw) / w) / w
    # fold first fftshift: roll the output (row) index
    a = np.roll(a, h // 2, axis=0)
    b = np.roll(b, w // 2, axis=0)
    # inverse DFT, norm='forward' (no scaling on the inverse pass)
    ci = np.exp(2j * np.pi * np.outer(ih, ih) / h)
    d = np.exp(2j * np.pi * np.outer(iw, iw) / w)
    # fold second fftshift: roll the input (column) index
    ci = np.roll(ci, -(h // 2), axis=1)
    d = np.roll(d, -(w // 2), axis=1)
    l = ci @ a          # (h, h) complex128
    r = b.T @ d.T       # (w, w) complex128
    return l, r


@functools.lru_cache(maxsize=None)
def _flat_op_np(h, w):
    """Single real operator M (HW, HW):  out_row = x_row @ M  (row-major)."""
    l, r = _folded_lr_np(h, w)
    m = np.kron(l.real.T, r.real) - np.kron(l.imag.T, r.imag)
    return np.ascontiguousarray(m.astype(np.float32))


@functools.lru_cache(maxsize=None)
def _slab_ops_np(h, w, tb):
    """Slab-kernel operands: fused [L_re; L_im] stack and block-diagonal R."""
    l, r = _folded_lr_np(h, w)
    lstack = np.ascontiguousarray(
        np.concatenate([l.real, l.imag], axis=0).astype(np.float32))  # (2H, H)
    eye = np.eye(tb)
    rre = np.ascontiguousarray(np.kron(eye, r.real).astype(np.float32))
    rim = np.ascontiguousarray(np.kron(eye, r.imag).astype(np.float32))
    return lstack, rre, rim


# --------------------------------------------------------------------------- #
# Kernels.                                                                     #
# --------------------------------------------------------------------------- #
def _flat_kernel(x_ref, m_ref, o_ref):
    # out = | x @ M |  -- one f32 MXU matmul per (rows, HW) block.
    o_ref[...] = jnp.abs(
        jnp.dot(x_ref[...], m_ref[...], preferred_element_type=jnp.float32))


def _slab_kernel(x_ref, lstack_ref, rre_ref, rim_ref, o_ref):
    # One (H, TB*W) slab of TB images: out = | L_re X R_re - L_im X R_im |
    # with the re/im pair on the L side fused into one stacked matmul.
    dot = functools.partial(jnp.dot, preferred_element_type=jnp.float32)
    p = dot(lstack_ref[...], x_ref[...])              # (2H, TB*W)
    hh = lstack_ref.shape[1]                          # == H (multiple of 8)
    z = dot(p[:hh, :], rre_ref[...]) - dot(p[hh:, :], rim_ref[...])
    o_ref[...] = jnp.abs(z)


# --------------------------------------------------------------------------- #
# Wrappers.                                                                    #
# --------------------------------------------------------------------------- #
_FLAT_HW_MAX = 512   # use the single-operator path while M=(HW,HW) stays tiny


def _fft_prompt_flat(x2, h, w):
    """x2: (NC, H*W) f32 -> (NC, H*W). One matmul against the folded operator."""
    nc, hw = x2.shape
    m_op = jnp.asarray(_flat_op_np(h, w))             # (HW, HW) f32, cached

    nc_pad = -(-nc // 8) * 8
    # Row tile: whole batch when small; otherwise 128-row tiles so the grid has
    # >= 2 "parallel" steps and both v7x TensorCores get work.
    if nc_pad <= 128:
        tm = nc_pad
    else:
        tm = 128
        nc_pad = -(-nc_pad // tm) * tm
    if nc_pad != nc:
        x2 = jnp.pad(x2, ((0, nc_pad - nc), (0, 0)))
    g = nc_pad // tm

    out = pl.pallas_call(
        _flat_kernel,
        out_shape=jax.ShapeDtypeStruct((nc_pad, hw), jnp.float32),
        grid_spec=pltpu.PrefetchScalarGridSpec(
            num_scalar_prefetch=0,
            grid=(g,),
            in_specs=[
                pl.BlockSpec((tm, hw), lambda i: (i, 0)),
                # grid-invariant operator: single-buffered (v7x VMEM friendly)
                pl.BlockSpec((hw, hw), lambda i: (0, 0),
                             pipeline_mode=pl.Buffered(1)),
            ],
            out_specs=pl.BlockSpec((tm, hw), lambda i: (i, 0)),
        ),
        compiler_params=pltpu.CompilerParams(
            dimension_semantics=("parallel",)),
    )(x2, m_op)
    return out[:nc]


def _fft_prompt_slab(x3, h, w):
    """x3: (NC, H, W) f32 -> (NC, H, W). (H, TB*W) lane-dense slab kernel."""
    nc = x3.shape[0]
    # TB images per slab so the lane dimension is >= 128 (128 target keeps v5e
    # optimal; on v6e/v7x a 256-lane target would also be fine when VMEM allows).
    tb = max(1, -(-128 // w))
    g = -(-nc // tb)
    nc_pad = g * tb
    assert g == 1 or h % 8 == 0, "sublane tiling needs H % 8 == 0 when G > 1"

    if nc_pad != nc:
        x3 = jnp.pad(x3, ((0, nc_pad - nc), (0, 0), (0, 0)))
    if tb == 1:
        xs = x3.reshape(g * h, w)           # pure reshape, no transpose copy
    else:
        xs = x3.reshape(g, tb, h, w).transpose(0, 2, 1, 3).reshape(g * h, tb * w)

    lstack, rre, rim = map(jnp.asarray, _slab_ops_np(h, w, tb))
    tbw = tb * w

    slab_spec = pl.BlockSpec((h, tbw), lambda i: (i, 0))
    lstack_spec = pl.BlockSpec((2 * h, h), lambda i: (0, 0),
                               pipeline_mode=pl.Buffered(1))
    r_spec = pl.BlockSpec((tbw, tbw), lambda i: (0, 0),
                          pipeline_mode=pl.Buffered(1))

    out = pl.pallas_call(
        _slab_kernel,
        out_shape=jax.ShapeDtypeStruct((g * h, tbw), jnp.float32),
        grid_spec=pltpu.PrefetchScalarGridSpec(
            num_scalar_prefetch=0,
            grid=(g,),
            in_specs=[slab_spec, lstack_spec, r_spec, r_spec],
            out_specs=slab_spec,
        ),
        compiler_params=pltpu.CompilerParams(
            dimension_semantics=("parallel",)),
    )(xs, lstack, rre, rim)

    if tb == 1:
        return out.reshape(nc_pad, h, w)[:nc]
    out = out.reshape(g, h, tb, w).transpose(0, 2, 1, 3).reshape(nc_pad, h, w)
    return out[:nc]


def fft_prompt(x, rate=0.25, prompt_type='highpass'):
    """Pallas implementation of FFTPrompt.forward. x: (N, C, H, W)."""
    assert prompt_type in ('highpass', 'lowpass')
    n, c, h, w = x.shape
    nc = n * c
    del rate  # with the reproduced mask bug the mask is all-zero: rate is inert

    if prompt_type == 'lowpass':
        # factor == mask == 0 everywhere -> output is exactly zero; skip
        # operator construction, DMA and the kernel entirely.
        return jnp.zeros(x.shape, jnp.float32)

    if h * w <= _FLAT_HW_MAX:
        out = _fft_prompt_flat(x.reshape(nc, h * w).astype(jnp.float32), h, w)
    else:
        out = _fft_prompt_slab(x.reshape(nc, h, w).astype(jnp.float32), h, w)
    out = out.reshape(n, c, h, w)

    # torch.fft.fftshift(dim=None) also rolls the N and C axes; applied twice
    # this is a net roll by 2*(dim//2), a no-op only for even dims.  The mask
    # factor is constant over (N, C), so a post-kernel roll is exact.
    sn = (2 * (n // 2)) % n
    sc = (2 * (c // 2)) % c
    if sn:
        out = jnp.roll(out, sn, axis=0)
    if sc:
        out = jnp.roll(out, sc, axis=1)
    return out


# --------------------------------------------------------------------------- #
# Float64 numpy reference mirroring the PyTorch module line by line.           #
# --------------------------------------------------------------------------- #
def fft_prompt_ref(x, rate=0.25, prompt_type='highpass'):
    x = np.asarray(x, dtype=np.float64)
    fft = np.fft.fft2(x, norm='forward')
    fft = np.fft.fftshift(fft)                     # all dims, like torch default
    h, w = x.shape[2:]
    radio = int((h * w * rate) ** 0.5 // 2)
    mask = np.zeros_like(x)
    c_h, c_w = h // 2, w // 2
    mask[:, :, c_h - radio:c_h + radio, c_w - radio:c_w + radio] = 0
    if prompt_type == 'highpass':
        fft = fft * (1 - mask)
    else:
        fft = fft * mask
    shift = np.fft.fftshift(fft)
    inv = np.fft.ifft2(shift, norm='forward')
    return np.abs(inv.real)


if __name__ == "__main__":
    key = jax.random.PRNGKey(0)
    k1, k2 = jax.random.split(key)

    # Small-image path: single flattened operator, one MXU matmul.
    x = jax.random.normal(k1, (2, 4, 16, 16), dtype=jnp.float32)
    out_hp = jax.block_until_ready(fft_prompt(x, 0.25, 'highpass'))
    np.testing.assert_allclose(np.asarray(out_hp),
                               fft_prompt_ref(x, 0.25, 'highpass'),
                               rtol=1e-4, atol=1e-4)
    out_lp = jax.block_until_ready(fft_prompt(x, 0.25, 'lowpass'))
    np.testing.assert_allclose(np.asarray(out_lp),
                               fft_prompt_ref(x, 0.25, 'lowpass'),
                               rtol=1e-4, atol=1e-4)

    # Larger-image path: slab kernel, fused L-stack + block-diagonal R.
    x2 = jax.random.normal(k2, (2, 2, 32, 64), dtype=jnp.float32)
    out2 = jax.block_until_ready(fft_prompt(x2, 0.25, 'highpass'))
    np.testing.assert_allclose(np.asarray(out2),
                               fft_prompt_ref(x2, 0.25, 'highpass'),
                               rtol=1e-4, atol=1e-4)

    print("KERNEL_OK")
</pallas_src>

<mosaic_0001>
module attributes {stable_mosaic.version = 11 : i64} {
  func.func @_flat_kernel(%arg0: i32, %arg1: memref<8x256xf32, #tpu.memory_space<vmem>>, %arg2: memref<256x256xf32, #tpu.memory_space<vmem>>, %arg3: memref<8x256xf32, #tpu.memory_space<vmem>>) attributes {dimension_semantics = [#tpu.dimension_semantics<parallel>], iteration_bounds = array<i64: 1>, scalar_prefetch = 0 : i64, scratch_operands = 0 : i64, tpu.core_type = #tpu.core_type<tc>, window_params = [{transform_indices = @transform_0, window_bounds = array<i64: 8, 256>}, {pipeline_mode = #tpu.pipeline_mode<synchronous>, transform_indices = @transform_1, window_bounds = array<i64: 256, 256>}, {transform_indices = @transform_2, window_bounds = array<i64: 8, 256>}]} {
    %c0 = arith.constant 0 : index
    %c0_0 = arith.constant 0 : index
    %0 = vector.load %arg1[%c0, %c0_0] : memref<8x256xf32, #tpu.memory_space<vmem>>, vector<8x256xf32>
    %c0_1 = arith.constant 0 : index
    %c0_2 = arith.constant 0 : index
    %1 = vector.load %arg2[%c0_1, %c0_2] : memref<256x256xf32, #tpu.memory_space<vmem>>, vector<256x256xf32>
    %cst = arith.constant dense<0.000000e+00> : vector<8x256xf32>
    %2 = tpu.matmul %0, %1, %cst {dimension_numbers = #tpu.dot_dimension_numbers<[1], [0], [0], [1], [0, 0, 1, 1], [], []>} : vector<8x256xf32>, vector<256x256xf32>, vector<8x256xf32> -> vector<8x256xf32>
    %3 = math.absf %2 : vector<8x256xf32>
    %c0_3 = arith.constant 0 : index
    %c0_4 = arith.constant 0 : index
    %4 = vector.load %arg3[%c0_3, %c0_4] : memref<8x256xf32, #tpu.memory_space<vmem>>, vector<8x256xf32>
    tpu.vector_store %arg3[%c0_3, %c0_4], %3 {strides = array<i32>} : memref<8x256xf32, #tpu.memory_space<vmem>>, vector<8x256xf32>,
    return
  }
  func.func @transform_0(%arg0: i32) -> (i32, i32) {
    %c0_i32 = arith.constant 0 : i32
    %c0_i32_0 = arith.constant 0 : i32
    return %arg0, %c0_i32 : i32, i32
  }
  func.func @transform_1(%arg0: i32) -> (i32, i32) {
    %c0_i32 = arith.constant 0 : i32
    %c0_i32_0 = arith.constant 0 : i32
    %c0_i32_1 = arith.constant 0 : i32
    return %c0_i32, %c0_i32_0 : i32, i32
  }
  func.func @transform_2(%arg0: i32) -> (i32, i32) {
    %c0_i32 = arith.constant 0 : i32
    %c0_i32_0 = arith.constant 0 : i32
    return %arg0, %c0_i32 : i32, i32
  }
}

</mosaic_0001>

<llo_original>
// kernel: tpu_custom_call.1
$region0: #{tpu_custom_call.1}
  #allocation0 [shape = 'u32[]', space=smem, size = 0x4, offset = 0x4, fixed_abs, tag = 'smem constant byte address 0x4 - core index']
  #allocation1 [shape = 'u32[72,128]{1,0:T(1,128)}', space=vmem, size = 0x9000, scoped, tag = 'internal scratch']
  %s0 = inlined_call_operand.hbm [shape: f32[8,256], index: 0, kind: input, shape index: {}]
  %s1 = inlined_call_operand.hbm [shape: f32[256,256], index: 1, kind: input, shape index: {}]
  %s2 = inlined_call_operand.hbm [shape: f32[8,256], index: 2, kind: output, shape index: {}]
  %s3 = sld [smem:[#allocation0]]
  $region26: #{tpu_custom_call.1} parent=0
    _
  %s5 = ssub.s32 1, %s3
  %s6 = scalar_select 0, %s5, %s3
  $region1: #{tpu_custom_call.1} parent=0
    #allocation2 [shape = 'u8[8192]{0}', space=vmem, size = 0x2000, scoped, tag = 'input window, operand 0, single buffered']
    #allocation3 [shape = 's32[1]{0}', space=sflag, size = 0x4, scoped, tag = 'scoped memory for tpu_custom_call.1']
    #allocation4 [shape = 's32[1]{0}', space=sflag, size = 0x4, scoped, tag = 'scoped memory for tpu_custom_call.1']
    #allocation5 [shape = 'u8[262144]{0}', space=vmem, size = 0x40000, scoped, tag = 'input window, operand 1, single buffered']
    #allocation6 [shape = 's32[1]{0}', space=sflag, size = 0x4, scoped, tag = 'scoped memory for tpu_custom_call.1']
    #allocation7 [shape = 'u8[8192]{0}', space=vmem, size = 0x2000, scoped, tag = 'output window, operand 0, single buffered']
    %7 = vsyncpa [#allocation3], 0
    %8 = vsyncpa [#allocation6], 0
    %9 = vsyncpa [#allocation4], 0
    // Predicated region
    $region2: #{tpu_custom_call.1} parent=1 // pred_check
      _
    $region3: #{tpu_custom_call.1} parent=1 // pred_check_branch
      %11 = sbr.rel (0) target = $region5
    $region4: #{tpu_custom_call.1} parent=1 // pred_region
      %13 = vsyncadd [#allocation3], 0
      %s15 = sshll.u32 %s0, 4
      %s16 = int_to_ptr.hbm [resolvable:$true] %s15
      %s17 = sshll.u32 [#allocation2], 4
      %s18 = int_to_ptr.vmem [resolvable:$true] %s17
      %20 = dma.hbm_to_vmem [thread:$0]  %s16, 256, %s18, [#allocation3]
    $region5: #{tpu_custom_call.1} parent=1 // pred_fallthru
      _
    // Predicated region
    $region6: #{tpu_custom_call.1} parent=1 // pred_check
      _
    $region7: #{tpu_custom_call.1} parent=1 // pred_check_branch
      %22 = sbr.rel (0) target = $region9
    $region8: #{tpu_custom_call.1} parent=1 // pred_region
      %24 = vsyncadd [#allocation6], 0
      %s25 = sshll.u32 %s1, 4
      %s26 = int_to_ptr.hbm [resolvable:$true] %s25
      %s27 = sshll.u32 [#allocation5], 4
      %s28 = int_to_ptr.vmem [resolvable:$true] %s27
      %33 = dma.hbm_to_vmem [thread:$0]  %s26, 8192, %s28, [#allocation6], 256, 256, 16
    $region9: #{tpu_custom_call.1} parent=1 // pred_fallthru
      _
    // Predicated region
    $region10: #{tpu_custom_call.1} parent=1 // pred_check
      _
    $region11: #{tpu_custom_call.1} parent=1 // pred_check_branch
      %35 = sbr.rel (0) target = $region13
    $region12: #{tpu_custom_call.1} parent=1 // pred_region
      %37 = dma.done [#allocation3], 256
    $region13: #{tpu_custom_call.1} parent=1 // pred_fallthru
      _
    // Predicated region
    $region14: #{tpu_custom_call.1} parent=1 // pred_check
      _
    $region15: #{tpu_custom_call.1} parent=1 // pred_check_branch
      %39 = sbr.rel (0) target = $region17
    $region16: #{tpu_custom_call.1} parent=1 // pred_region
      %41 = dma.done [#allocation6], 8192
    $region17: #{tpu_custom_call.1} parent=1 // pred_fallthru
      _
    %v42 = vld [vmem:[#allocation2] sm:$0xff]
    %v43 = vld [vmem:[#allocation2 + $0x8] sm:$0xff]
    %v44 = vld [vmem:[#allocation5] sm:$0xff]
    %v45 = vld [vmem:[#allocation5 + $0x8] sm:$0xff]
    %v46 = vld [vmem:[#allocation5 + $0x10] sm:$0xff]
    %v47 = vld [vmem:[#allocation5 + $0x18] sm:$0xff]
    %v48 = vld [vmem:[#allocation5 + $0x20] sm:$0xff]
    %v49 = vld [vmem:[#allocation5 + $0x28] sm:$0xff]
    %v50 = vld [vmem:[#allocation5 + $0x30] sm:$0xff]
    %v51 = vld [vmem:[#allocation5 + $0x38] sm:$0xff]
    %v52 = vld [vmem:[#allocation5 + $0x40] sm:$0xff]
    %v53 = vld [vmem:[#allocation5 + $0x48] sm:$0xff]
    %v54 = vld [vmem:[#allocation5 + $0x50] sm:$0xff]
    %v55 = vld [vmem:[#allocation5 + $0x58] sm:$0xff]
    %v56 = vld [vmem:[#allocation5 + $0x60] sm:$0xff]
    %v57 = vld [vmem:[#allocation5 + $0x68] sm:$0xff]
    %v58 = vld [vmem:[#allocation5 + $0x70] sm:$0xff]
    %v59 = vld [vmem:[#allocation5 + $0x78] sm:$0xff]
    %v60 = vld [vmem:[#allocation5 + $0x80] sm:$0xff]
    %v61 = vld [vmem:[#allocation5 + $0x88] sm:$0xff]
    %v62 = vld [vmem:[#allocation5 + $0x90] sm:$0xff]
    %v63 = vld [vmem:[#allocation5 + $0x98] sm:$0xff]
    %v64 = vld [vmem:[#allocation5 + $0xa0] sm:$0xff]
    %v65 = vld [vmem:[#allocation5 + $0xa8] sm:$0xff]
    %v66 = vld [vmem:[#allocation5 + $0xb0] sm:$0xff]
    %v67 = vld [vmem:[#allocation5 + $0xb8] sm:$0xff]
    %v68 = vld [vmem:[#allocation5 + $0xc0] sm:$0xff]
    %v69 = vld [vmem:[#allocation5 + $0xc8] sm:$0xff]
    %v70 = vld [vmem:[#allocation5 + $0xd0] sm:$0xff]
    %v71 = vld [vmem:[#allocation5 + $0xd8] sm:$0xff]
    %v72 = vld [vmem:[#allocation5 + $0xe0] sm:$0xff]
    %v73 = vld [vmem:[#allocation5 + $0xe8] sm:$0xff]
    %v74 = vld [vmem:[#allocation5 + $0xf0] sm:$0xff]
    %v75 = vld [vmem:[#allocation5 + $0xf8] sm:$0xff]
    %v76 = vld [vmem:[#allocation5 + $0x100] sm:$0xff]
    %v77 = vld [vmem:[#allocation5 + $0x108] sm:$0xff]
    %v78 = vld [vmem:[#allocation5 + $0x110] sm:$0xff]
    %v79 = vld [vmem:[#allocation5 + $0x118] sm:$0xff]
    %v80 = vld [vmem:[#allocation5 + $0x120] sm:$0xff]
    %v81 = vld [vmem:[#allocation5 + $0x128] sm:$0xff]
    %v82 = vld [vmem:[#allocation5 + $0x130] sm:$0xff]
    %v83 = vld [vmem:[#allocation5 + $0x138] sm:$0xff]
    %v84 = vld [vmem:[#allocation5 + $0x140] sm:$0xff]
    %v85 = vld [vmem:[#allocation5 + $0x148] sm:$0xff]
    %v86 = vld [vmem:[#allocation5 + $0x150] sm:$0xff]
    %v87 = vld [vmem:[#allocation5 + $0x158] sm:$0xff]
    %v88 = vld [vmem:[#allocation5 + $0x160] sm:$0xff]
    %v89 = vld [vmem:[#allocation5 + $0x168] sm:$0xff]
    %v90 = vld [vmem:[#allocation5 + $0x170] sm:$0xff]
    %v91 = vld [vmem:[#allocation5 + $0x178] sm:$0xff]
    %v92 = vld [vmem:[#allocation5 + $0x180] sm:$0xff]
    %v93 = vld [vmem:[#allocation5 + $0x188] sm:$0xff]
    %v94 = vld [vmem:[#allocation5 + $0x190] sm:$0xff]
    %v95 = vld [vmem:[#allocation5 + $0x198] sm:$0xff]
    %v96 = vld [vmem:[#allocation5 + $0x1a0] sm:$0xff]
    %v97 = vld [vmem:[#allocation5 + $0x1a8] sm:$0xff]
    %v98 = vld [vmem:[#allocation5 + $0x1b0] sm:$0xff]
    %v99 = vld [vmem:[#allocation5 + $0x1b8] sm:$0xff]
    %v100 = vld [vmem:[#allocation5 + $0x1c0] sm:$0xff]
    %v101 = vld [vmem:[#allocation5 + $0x1c8] sm:$0xff]
    %v102 = vld [vmem:[#allocation5 + $0x1d0] sm:$0xff]
    %v103 = vld [vmem:[#allocation5 + $0x1d8] sm:$0xff]
    %v104 = vld [vmem:[#allocation5 + $0x1e0] sm:$0xff]
    %v105 = vld [vmem:[#allocation5 + $0x1e8] sm:$0xff]
    %v106 = vld [vmem:[#allocation5 + $0x1f0] sm:$0xff]
    %v107 = vld [vmem:[#allocation5 + $0x1f8] sm:$0xff]
    %108 = vmatpush.msra.mxu0 %v74
    %109 = vmatpush.msra.mxu0 %v72
    %110 = vmatpush.msra.mxu0 %v70
    %111 = vmatpush.msra.mxu0 %v68
    %112 = vmatpush.msra.mxu0 %v66
    %113 = vmatpush.msra.mxu0 %v64
    %114 = vmatpush.msra.mxu0 %v62
    %115 = vmatpush.msra.mxu0 %v60
    %116 = vmatpush.msra.mxu0 %v58
    %117 = vmatpush.msra.mxu0 %v56
    %118 = vmatpush.msra.mxu0 %v54
    %119 = vmatpush.msra.mxu0 %v52
    %120 = vmatpush.msra.mxu0 %v50
    %121 = vmatpush.msra.mxu0 %v48
    %122 = vmatpush.msra.mxu0 %v46
    %123 = vmatpush.msra.mxu0 %v44
    %124 = vmatmul.f32.gmra.mxu0 %v42
    %v125 = vpop.f32.mrf.mxu0
    %v126 = vadd.f32 0.0, %v125
    %127 = vdwg.mxu0
    %128 = vmatpush.msra.mxu0 %v106
    %129 = vmatpush.msra.mxu0 %v104
    %130 = vmatpush.msra.mxu0 %v102
    %131 = vmatpush.msra.mxu0 %v100
    %132 = vmatpush.msra.mxu0 %v98
    %133 = vmatpush.msra.mxu0 %v96
    %134 = vmatpush.msra.mxu0 %v94
    %135 = vmatpush.msra.mxu0 %v92
    %136 = vmatpush.msra.mxu0 %v90
    %137 = vmatpush.msra.mxu0 %v88
    %138 = vmatpush.msra.mxu0 %v86
    %139 = vmatpush.msra.mxu0 %v84
    %140 = vmatpush.msra.mxu0 %v82
    %141 = vmatpush.msra.mxu0 %v80
    %142 = vmatpush.msra.mxu0 %v78
    %143 = vmatpush.msra.mxu0 %v76
    %144 = vmatmul.f32.gmra.mxu0 %v43
    %v145 = vpop.f32.mrf.mxu0
    %v146 = vadd.f32 %v126, %v145
    %147 = vdwg.mxu0
    %148 = vmatpush.msra.mxu0 %v75
    %149 = vmatpush.msra.mxu0 %v73
    %150 = vmatpush.msra.mxu0 %v71
    %151 = vmatpush.msra.mxu0 %v69
    %152 = vmatpush.msra.mxu0 %v67
    %153 = vmatpush.msra.mxu0 %v65
    %154 = vmatpush.msra.mxu0 %v63
    %155 = vmatpush.msra.mxu0 %v61
    %156 = vmatpush.msra.mxu0 %v59
    %157 = vmatpush.msra.mxu0 %v57
    %158 = vmatpush.msra.mxu0 %v55
    %159 = vmatpush.msra.mxu0 %v53
    %160 = vmatpush.msra.mxu0 %v51
    %161 = vmatpush.msra.mxu0 %v49
    %162 = vmatpush.msra.mxu0 %v47
    %163 = vmatpush.msra.mxu0 %v45
    %164 = vmatmul.f32.gmra.mxu0 %v42
    %v165 = vpop.f32.mrf.mxu0
    %v166 = vadd.f32 0.0, %v165
    %167 = vdwg.mxu0
    %168 = vmatpush.msra.mxu0 %v107
    %169 = vmatpush.msra.mxu0 %v105
    %170 = vmatpush.msra.mxu0 %v103
    %171 = vmatpush.msra.mxu0 %v101
    %172 = vmatpush.msra.mxu0 %v99
    %173 = vmatpush.msra.mxu0 %v97
    %174 = vmatpush.msra.mxu0 %v95
    %175 = vmatpush.msra.mxu0 %v93
    %176 = vmatpush.msra.mxu0 %v91
    %177 = vmatpush.msra.mxu0 %v89
    %178 = vmatpush.msra.mxu0 %v87
    %179 = vmatpush.msra.mxu0 %v85
    %180 = vmatpush.msra.mxu0 %v83
    %181 = vmatpush.msra.mxu0 %v81
    %182 = vmatpush.msra.mxu0 %v79
    %183 = vmatpush.msra.mxu0 %v77
    %184 = vmatmul.f32.gmra.mxu0 %v43
    %v185 = vpop.f32.mrf.mxu0
    %v186 = vadd.f32 %v166, %v185
    %187 = vdwg.mxu0
    %v188 = vand.u32 2147483647, %v146
    %v189 = vand.u32 2147483647, %v186
    %190 = vst [vmem:[#allocation7] sm:$0xff] %v188
    %191 = vst [vmem:[#allocation7 + $0x8] sm:$0xff] %v189
    // Predicated region
    $region18: #{tpu_custom_call.1} parent=1 // pred_check
      _
    $region19: #{tpu_custom_call.1} parent=1 // pred_check_branch
      %193 = sbr.rel (0) target = $region21
    $region20: #{tpu_custom_call.1} parent=1 // pred_region
      %195 = vsyncadd [#allocation4], 0
      %s197 = sshll.u32 [#allocation7], 4
      %s198 = int_to_ptr.vmem [resolvable:$true] %s197
      %s199 = sshll.u32 %s2, 4
      %s200 = int_to_ptr.hbm [resolvable:$true] %s199
      %202 = dma.vmem_to_hbm [thread:$0]  %s198, 256, %s200, [#allocation4]
    $region21: #{tpu_custom_call.1} parent=1 // pred_fallthru
      _
    // Predicated region
    $region22: #{tpu_custom_call.1} parent=1 // pred_check
      _
    $region23: #{tpu_custom_call.1} parent=1 // pred_check_branch
      %204 = sbr.rel (0) target = $region25
    $region24: #{tpu_custom_call.1} parent=1 // pred_region
      %206 = dma.done [#allocation4], 256
    $region25: #{tpu_custom_call.1} parent=1 // pred_fallthru
      _
    %207 = vsyncpa [#allocation3], 1
    %208 = vsyncpa [#allocation6], 1
    %209 = vsyncpa [#allocation4], 1

</llo_original>
